<compile_context>
chip_gen: v7x
topology: tpu7x:2x2x1
jax: 0.10.0
libtpu: 0.0.40
codegen_flags: <defaults>
</compile_context>

<pallas_src>
import functools

import jax
import jax.numpy as jnp
from jax.experimental import pallas as pl
from jax.experimental.pallas import tpu as pltpu


def _leaky(x, alpha=0.2):
    # nn.LeakyReLU(0.2) as used by the SPE module.
    return jnp.where(x > 0, x, alpha * x)


def spe_kernel(x_ref, wslab_ref, mask_ref, out_ref, patch_ref, *, W, Cmid, Hid):
    Bt, C, HW = x_ref.shape

    # ---- grid-step constants, hoisted out of the per-image loop ------------
    # Border masks (lane-only constants, precomputed on host): broadcast once
    # to (C, HW) so every jnp.where below is a plain VPU select.
    def border(r):
        return jnp.broadcast_to(mask_ref[r:r + 1, :] != 0, (C, HW))
    m_row_first, m_row_last = border(0), border(1)
    m_col_first, m_col_last = border(2), border(3)

    # Weight sub-views from the packed slab (single constant-index operand).
    o = 0
    w1 = wslab_ref[o:o + Cmid, 0:9 * C]            # (Cmid, 9C)  conv3x3
    o += Cmid
    w2 = wslab_ref[o:o + C, 0:Cmid]                # (C, Cmid)   conv1x1
    o += C
    m1a_w = wslab_ref[o:o + Hid, 0:C]              # (Hid, C)    mlp1 linear 1
    o += Hid
    m1a_b = wslab_ref[o:o + Hid, 0:1]              # (Hid, 1)
    o += Hid
    m1b_w = wslab_ref[o:o + C, 0:Hid]              # (C, Hid)    mlp1 linear 2
    o += C
    m1b_b = wslab_ref[o:o + C, 0:1]                # (C, 1)

    # ---- per-image body, statically unrolled over the Bt folded images -----
    # (Python unroll == fully-unrolled fori_loop: static ref indices, full LLO
    # scheduler visibility across the independent image bodies.)
    for img in range(Bt):
        x = x_ref[img].astype(jnp.float32)          # (C, HW), lane-dense

        # 3x3 reflection padding via XLU rolls + precomputed border masks.
        prv_row = pltpu.roll(x, shift=W, axis=1)            # value at (i-1, j)
        nxt_row = pltpu.roll(x, shift=HW - W, axis=1)       # value at (i+1, j)
        row_m1 = jnp.where(m_row_first, nxt_row, prv_row)   # reflect -1 -> 1
        row_p1 = jnp.where(m_row_last, prv_row, nxt_row)    # reflect H -> H-2

        # Write the 9 taps straight into the VMEM patch scratch; contraction
        # index is (dh*3 + dw)*C + c, matching the flattened conv3x3 weight.
        t = 0
        for a in (row_m1, x, row_p1):
            prv_col = pltpu.roll(a, shift=1, axis=1)         # value at col j-1
            nxt_col = pltpu.roll(a, shift=HW - 1, axis=1)    # value at col j+1
            for tap in (jnp.where(m_col_first, nxt_col, prv_col),   # dw = 0
                        a,                                          # dw = 1
                        jnp.where(m_col_last, prv_col, nxt_col)):   # dw = 2
                patch_ref[t * C:(t + 1) * C, :] = tap
                t += 1

        # conv3x3 as one fused MXU matmul + LeakyReLU(0.2)
        mid = _leaky(jnp.dot(w1, patch_ref[...],
                             preferred_element_type=jnp.float32))   # (Cmid,HW)

        # conv1x1 + LeakyReLU
        xc = _leaky(jnp.dot(w2, mid,
                            preferred_element_type=jnp.float32))    # (C, HW)

        # AdaptiveAvgPool2d(1): mean over spatial positions (lane reduce)
        pooled = jnp.mean(xc, axis=1, keepdims=True)                # (C, 1)

        # mlp1 in column form: Linear -> LeakyReLU -> Linear
        h1 = _leaky(jnp.dot(m1a_w, pooled,
                            preferred_element_type=jnp.float32) + m1a_b)
        m = jnp.dot(m1b_w, h1,
                    preferred_element_type=jnp.float32) + m1b_b     # (C, 1)

        # score = softmax(outer(m, m), axis=1) with exact normalization
        score = m * jnp.transpose(m)                                # (C, C)
        score = score - jnp.max(score, axis=1, keepdims=True)
        p = jnp.exp(score)
        score = p / jnp.sum(p, axis=1, keepdims=True)

        # out = residual + score @ bn   (bn == xc in (C, H*W) layout)
        y = jnp.dot(score, xc, preferred_element_type=jnp.float32)  # (C, HW)
        out_ref[img] = (xc + y).astype(out_ref.dtype)


def _pick_images_per_step(batch):
    """Fold up to 8 images per grid step to amortize per-step overhead, while
    keeping the grid length >= 2 (v7x megacore sharding of the 'parallel'
    batch axis; neutral on single-TC v5e/v6e)."""
    best = 1
    for bt in range(1, 9):
        if batch % bt == 0 and (batch // bt >= 2 or batch == 1):
            best = bt
    return best


def spe_forward(x_nchw, params, *, images_per_step=None):
    """Pallas implementation of SPE.forward. Input / output are NCHW."""
    B, C, H, W = x_nchw.shape
    HW = H * W

    w1 = params["conv1_w"]                          # (3, 3, C, Cmid)  (HWIO)
    Cmid = w1.shape[3]
    Hid = params["mlp1_w1"].shape[1]

    # ---- pack the six small weight/bias operands into ONE f32 slab ---------
    # Flattened conv3x3 weight: contraction index = (dh*3 + dw)*C + c.
    w1_2d = jnp.transpose(w1, (3, 0, 1, 2)).reshape(Cmid, 9 * C)
    w2_t = jnp.transpose(params["conv2_w"])         # (C, Cmid)
    m1a_w = jnp.transpose(params["mlp1_w1"])        # (Hid, C)
    m1a_b = params["mlp1_b1"].reshape(-1, 1)        # (Hid, 1)
    m1b_w = jnp.transpose(params["mlp1_w2"])        # (C, Hid)
    m1b_b = params["mlp1_b2"].reshape(-1, 1)        # (C, 1)

    rows = Cmid + 3 * C + 2 * Hid
    R = ((rows + 7) // 8) * 8
    LW = max(128, ((9 * C + 127) // 128) * 128)
    slab = jnp.zeros((R, LW), jnp.float32)
    o = 0
    for arr in (w1_2d, w2_t, m1a_w, m1a_b, m1b_w, m1b_b):
        r, c = arr.shape
        slab = slab.at[o:o + r, 0:c].set(arr.astype(jnp.float32))
        o += r

    # ---- host-precomputed reflection-border masks (lane constants) ---------
    pos = jnp.arange(HW, dtype=jnp.int32)
    col = pos % W
    masks = jnp.stack([pos < W, pos >= (H - 1) * W, col == 0, col == W - 1],
                      axis=0).astype(jnp.int32)     # (4, HW)
    masks = jnp.pad(masks, ((0, 4), (0, 0)))        # (8, HW): 8-sublane tile

    x_flat = x_nchw.reshape(B, C, HW)               # metadata-only reshape

    Bt = (images_per_step if images_per_step is not None
          else _pick_images_per_step(B))
    assert B % Bt == 0

    kernel = functools.partial(spe_kernel, W=W, Cmid=Cmid, Hid=Hid)

    out_flat = pl.pallas_call(
        kernel,
        out_shape=jax.ShapeDtypeStruct((B, C, HW), x_nchw.dtype),
        grid_spec=pltpu.PrefetchScalarGridSpec(
            num_scalar_prefetch=0,
            grid=(B // Bt,),
            in_specs=[
                pl.BlockSpec((Bt, C, HW), lambda b: (b, 0, 0)),
                pl.BlockSpec((R, LW), lambda b: (0, 0)),     # weight slab
                pl.BlockSpec((8, HW), lambda b: (0, 0)),      # border masks
            ],
            out_specs=pl.BlockSpec((Bt, C, HW), lambda b: (b, 0, 0)),
            scratch_shapes=[pltpu.VMEM((9 * C, HW), jnp.float32)],  # patch
        ),
        compiler_params=pltpu.CompilerParams(
            dimension_semantics=("parallel",),
            vmem_limit_bytes=32 * 1024 * 1024,
        ),
    )(x_flat, slab, masks)

    return out_flat.reshape(B, C, H, W)             # metadata-only reshape


def spe_reference(x_nchw, p):
    """Pure-JAX reference mirroring the PyTorch forward pass (NCHW)."""
    x = jnp.transpose(x_nchw, (0, 2, 3, 1))
    xpad = jnp.pad(x, ((0, 0), (1, 1), (1, 1), (0, 0)), mode="reflect")
    mid = jax.lax.conv_general_dilated(
        xpad, p["conv1_w"], (1, 1), "VALID",
        dimension_numbers=("NHWC", "HWIO", "NHWC"))
    mid = _leaky(mid)
    xc = _leaky(jnp.einsum("bhwm,mc->bhwc", mid, p["conv2_w"]))
    B, H, W, C = xc.shape
    pooled = jnp.mean(xc, axis=(1, 2))                              # (B, C)
    h1 = _leaky(pooled @ p["mlp1_w1"] + p["mlp1_b1"])
    m = h1 @ p["mlp1_w2"] + p["mlp1_b2"]                            # (B, C)
    score = jax.nn.softmax(m[:, :, None] * m[:, None, :], axis=2)   # (B, C, C)
    xc_chw = jnp.transpose(xc, (0, 3, 1, 2))                        # (B, C, H, W)
    bn = xc_chw.reshape(B, C, H * W)
    out = jnp.einsum("bij,bjp->bip", score, bn).reshape(B, C, H, W)
    return xc_chw + out


def make_params(key, in_channels, ratio):
    cmid = in_channels // 2
    hid = in_channels // ratio
    ks = jax.random.split(key, 6)
    s = 0.2
    return {
        "conv1_w": s * jax.random.normal(ks[0], (3, 3, in_channels, cmid), jnp.float32),
        "conv2_w": s * jax.random.normal(ks[1], (cmid, in_channels), jnp.float32),
        "mlp1_w1": s * jax.random.normal(ks[2], (in_channels, hid), jnp.float32),
        "mlp1_b1": s * jax.random.normal(ks[3], (hid,), jnp.float32),
        "mlp1_w2": s * jax.random.normal(ks[4], (hid, in_channels), jnp.float32),
        "mlp1_b2": s * jax.random.normal(ks[5], (in_channels,), jnp.float32),
    }


if __name__ == "__main__":
    B, C, H, W = 2, 8, 16, 16
    ratio = 2

    key = jax.random.PRNGKey(0)
    kx, kp = jax.random.split(key)
    x = jax.random.normal(kx, (B, C, H, W), jnp.float32)
    params = make_params(kp, C, ratio)

    out = spe_forward(x, params)
    out = jax.block_until_ready(out)

    ref = jax.block_until_ready(spe_reference(x, params))
    assert out.shape == (B, C, H, W)
    assert jnp.allclose(out, ref, rtol=5e-3, atol=5e-3), (
        f"max abs err {jnp.max(jnp.abs(out - ref))}")

    print("KERNEL_OK")
</pallas_src>

<mosaic_0001>
module attributes {stable_mosaic.version = 11 : i64} {
  func.func @spe_kernel(%arg0: i32, %arg1: memref<1x8x256xf32, #tpu.memory_space<vmem>>, %arg2: memref<40x128xf32, #tpu.memory_space<vmem>>, %arg3: memref<8x256xi32, #tpu.memory_space<vmem>>, %arg4: memref<1x8x256xf32, #tpu.memory_space<vmem>>, %arg5: memref<72x256xf32, #tpu.memory_space<vmem>>) attributes {dimension_semantics = [#tpu.dimension_semantics<parallel>], iteration_bounds = array<i64: 2>, scalar_prefetch = 0 : i64, scratch_operands = 1 : i64, tpu.core_type = #tpu.core_type<tc>, window_params = [{transform_indices = @transform_0, window_bounds = array<i64: 1, 8, 256>}, {pipeline_mode = #tpu.pipeline_mode<synchronous>, transform_indices = @transform_1, window_bounds = array<i64: 40, 128>}, {pipeline_mode = #tpu.pipeline_mode<synchronous>, transform_indices = @transform_2, window_bounds = array<i64: 8, 256>}, {transform_indices = @transform_3, window_bounds = array<i64: 1, 8, 256>}]} {
    %c0 = arith.constant 0 : index
    %c0_0 = arith.constant 0 : index
    %0 = vector.load %arg3[%c0, %c0_0] : memref<8x256xi32, #tpu.memory_space<vmem>>, vector<1x256xi32>
    %c0_i32 = arith.constant 0 : i32
    %1 = vector.broadcast %c0_i32 : i32 to vector<1x256xi32>
    %2 = arith.cmpi ne, %0, %1 : vector<1x256xi32>
    %3 = vector.shape_cast %2 : vector<1x256xi1> to vector<1x256xi1>
    %4 = vector.broadcast %3 : vector<1x256xi1> to vector<8x256xi1>
    %c1 = arith.constant 1 : index
    %c0_1 = arith.constant 0 : index
    %5 = vector.load %arg3[%c1, %c0_1] : memref<8x256xi32, #tpu.memory_space<vmem>>, vector<1x256xi32>
    %c0_i32_2 = arith.constant 0 : i32
    %6 = vector.broadcast %c0_i32_2 : i32 to vector<1x256xi32>
    %7 = arith.cmpi ne, %5, %6 : vector<1x256xi32>
    %8 = vector.shape_cast %7 : vector<1x256xi1> to vector<1x256xi1>
    %9 = vector.broadcast %8 : vector<1x256xi1> to vector<8x256xi1>
    %c2 = arith.constant 2 : index
    %c0_3 = arith.constant 0 : index
    %10 = vector.load %arg3[%c2, %c0_3] : memref<8x256xi32, #tpu.memory_space<vmem>>, vector<1x256xi32>
    %c0_i32_4 = arith.constant 0 : i32
    %11 = vector.broadcast %c0_i32_4 : i32 to vector<1x256xi32>
    %12 = arith.cmpi ne, %10, %11 : vector<1x256xi32>
    %13 = vector.shape_cast %12 : vector<1x256xi1> to vector<1x256xi1>
    %14 = vector.broadcast %13 : vector<1x256xi1> to vector<8x256xi1>
    %c3 = arith.constant 3 : index
    %c0_5 = arith.constant 0 : index
    %15 = vector.load %arg3[%c3, %c0_5] : memref<8x256xi32, #tpu.memory_space<vmem>>, vector<1x256xi32>
    %c0_i32_6 = arith.constant 0 : i32
    %16 = vector.broadcast %c0_i32_6 : i32 to vector<1x256xi32>
    %17 = arith.cmpi ne, %15, %16 : vector<1x256xi32>
    %18 = vector.shape_cast %17 : vector<1x256xi1> to vector<1x256xi1>
    %19 = vector.broadcast %18 : vector<1x256xi1> to vector<8x256xi1>
    %c0_7 = arith.constant 0 : index
    %c0_8 = arith.constant 0 : index
    %20 = vector.load %arg2[%c0_7, %c0_8] : memref<40x128xf32, #tpu.memory_space<vmem>>, vector<4x72xf32>
    %c4 = arith.constant 4 : index
    %c0_9 = arith.constant 0 : index
    %21 = vector.load %arg2[%c4, %c0_9] : memref<40x128xf32, #tpu.memory_space<vmem>>, vector<8x4xf32>
    %c12 = arith.constant 12 : index
    %c0_10 = arith.constant 0 : index
    %22 = vector.load %arg2[%c12, %c0_10] : memref<40x128xf32, #tpu.memory_space<vmem>>, vector<4x8xf32>
    %c16 = arith.constant 16 : index
    %c0_11 = arith.constant 0 : index
    %23 = vector.load %arg2[%c16, %c0_11] : memref<40x128xf32, #tpu.memory_space<vmem>>, vector<4x1xf32>
    %c20 = arith.constant 20 : index
    %c0_12 = arith.constant 0 : index
    %24 = vector.load %arg2[%c20, %c0_12] : memref<40x128xf32, #tpu.memory_space<vmem>>, vector<8x4xf32>
    %c28 = arith.constant 28 : index
    %c0_13 = arith.constant 0 : index
    %25 = vector.load %arg2[%c28, %c0_13] : memref<40x128xf32, #tpu.memory_space<vmem>>, vector<8x1xf32>
    %c0_14 = arith.constant 0 : index
    %c0_15 = arith.constant 0 : index
    %c0_16 = arith.constant 0 : index
    %26 = vector.load %arg1[%c0_14, %c0_15, %c0_16] : memref<1x8x256xf32, #tpu.memory_space<vmem>>, vector<1x8x256xf32>
    %27 = vector.shape_cast %26 : vector<1x8x256xf32> to vector<8x256xf32>
    %c16_i32 = arith.constant 16 : i32
    %28 = tpu.dynamic_rotate %27 by %c16_i32 dim 1 : vector<8x256xf32>, i32 -> vector<8x256xf32>
    %c240_i32 = arith.constant 240 : i32
    %29 = tpu.dynamic_rotate %27 by %c240_i32 dim 1 : vector<8x256xf32>, i32 -> vector<8x256xf32>
    %30 = arith.select %4, %29, %28 : vector<8x256xi1>, vector<8x256xf32>
    %31 = arith.select %9, %28, %29 : vector<8x256xi1>, vector<8x256xf32>
    %c1_i32 = arith.constant 1 : i32
    %32 = tpu.dynamic_rotate %30 by %c1_i32 dim 1 : vector<8x256xf32>, i32 -> vector<8x256xf32>
    %c255_i32 = arith.constant 255 : i32
    %33 = tpu.dynamic_rotate %30 by %c255_i32 dim 1 : vector<8x256xf32>, i32 -> vector<8x256xf32>
    %34 = arith.select %14, %33, %32 : vector<8x256xi1>, vector<8x256xf32>
    %35 = arith.select %19, %32, %33 : vector<8x256xi1>, vector<8x256xf32>
    %c0_17 = arith.constant 0 : index
    %c0_18 = arith.constant 0 : index
    %36 = vector.load %arg5[%c0_17, %c0_18] : memref<72x256xf32, #tpu.memory_space<vmem>>, vector<8x256xf32>
    tpu.vector_store %arg5[%c0_17, %c0_18], %34 {strides = array<i32>} : memref<72x256xf32, #tpu.memory_space<vmem>>, vector<8x256xf32>,
    %c8 = arith.constant 8 : index
    %c0_19 = arith.constant 0 : index
    %37 = vector.load %arg5[%c8, %c0_19] : memref<72x256xf32, #tpu.memory_space<vmem>>, vector<8x256xf32>
    tpu.vector_store %arg5[%c8, %c0_19], %30 {strides = array<i32>} : memref<72x256xf32, #tpu.memory_space<vmem>>, vector<8x256xf32>,
    %c16_20 = arith.constant 16 : index
    %c0_21 = arith.constant 0 : index
    %38 = vector.load %arg5[%c16_20, %c0_21] : memref<72x256xf32, #tpu.memory_space<vmem>>, vector<8x256xf32>
    tpu.vector_store %arg5[%c16_20, %c0_21], %35 {strides = array<i32>} : memref<72x256xf32, #tpu.memory_space<vmem>>, vector<8x256xf32>,
    %c1_i32_22 = arith.constant 1 : i32
    %39 = tpu.dynamic_rotate %27 by %c1_i32_22 dim 1 : vector<8x256xf32>, i32 -> vector<8x256xf32>
    %c255_i32_23 = arith.constant 255 : i32
    %40 = tpu.dynamic_rotate %27 by %c255_i32_23 dim 1 : vector<8x256xf32>, i32 -> vector<8x256xf32>
    %41 = arith.select %14, %40, %39 : vector<8x256xi1>, vector<8x256xf32>
    %42 = arith.select %19, %39, %40 : vector<8x256xi1>, vector<8x256xf32>
    %c24 = arith.constant 24 : index
    %c0_24 = arith.constant 0 : index
    %43 = vector.load %arg5[%c24, %c0_24] : memref<72x256xf32, #tpu.memory_space<vmem>>, vector<8x256xf32>
    tpu.vector_store %arg5[%c24, %c0_24], %41 {strides = array<i32>} : memref<72x256xf32, #tpu.memory_space<vmem>>, vector<8x256xf32>,
    %c32 = arith.constant 32 : index
    %c0_25 = arith.constant 0 : index
    %44 = vector.load %arg5[%c32, %c0_25] : memref<72x256xf32, #tpu.memory_space<vmem>>, vector<8x256xf32>
    tpu.vector_store %arg5[%c32, %c0_25], %27 {strides = array<i32>} : memref<72x256xf32, #tpu.memory_space<vmem>>, vector<8x256xf32>,
    %c40 = arith.constant 40 : index
    %c0_26 = arith.constant 0 : index
    %45 = vector.load %arg5[%c40, %c0_26] : memref<72x256xf32, #tpu.memory_space<vmem>>, vector<8x256xf32>
    tpu.vector_store %arg5[%c40, %c0_26], %42 {strides = array<i32>} : memref<72x256xf32, #tpu.memory_space<vmem>>, vector<8x256xf32>,
    %c1_i32_27 = arith.constant 1 : i32
    %46 = tpu.dynamic_rotate %31 by %c1_i32_27 dim 1 : vector<8x256xf32>, i32 -> vector<8x256xf32>
    %c255_i32_28 = arith.constant 255 : i32
    %47 = tpu.dynamic_rotate %31 by %c255_i32_28 dim 1 : vector<8x256xf32>, i32 -> vector<8x256xf32>
    %48 = arith.select %14, %47, %46 : vector<8x256xi1>, vector<8x256xf32>
    %49 = arith.select %19, %46, %47 : vector<8x256xi1>, vector<8x256xf32>
    %c48 = arith.constant 48 : index
    %c0_29 = arith.constant 0 : index
    %50 = vector.load %arg5[%c48, %c0_29] : memref<72x256xf32, #tpu.memory_space<vmem>>, vector<8x256xf32>
    tpu.vector_store %arg5[%c48, %c0_29], %48 {strides = array<i32>} : memref<72x256xf32, #tpu.memory_space<vmem>>, vector<8x256xf32>,
    %c56 = arith.constant 56 : index
    %c0_30 = arith.constant 0 : index
    %51 = vector.load %arg5[%c56, %c0_30] : memref<72x256xf32, #tpu.memory_space<vmem>>, vector<8x256xf32>
    tpu.vector_store %arg5[%c56, %c0_30], %31 {strides = array<i32>} : memref<72x256xf32, #tpu.memory_space<vmem>>, vector<8x256xf32>,
    %c64 = arith.constant 64 : index
    %c0_31 = arith.constant 0 : index
    %52 = vector.load %arg5[%c64, %c0_31] : memref<72x256xf32, #tpu.memory_space<vmem>>, vector<8x256xf32>
    tpu.vector_store %arg5[%c64, %c0_31], %49 {strides = array<i32>} : memref<72x256xf32, #tpu.memory_space<vmem>>, vector<8x256xf32>,
    %c0_32 = arith.constant 0 : index
    %c0_33 = arith.constant 0 : index
    %53 = vector.load %arg5[%c0_32, %c0_33] : memref<72x256xf32, #tpu.memory_space<vmem>>, vector<72x256xf32>
    %cst = arith.constant dense<0.000000e+00> : vector<4x256xf32>
    %54 = tpu.matmul %20, %53, %cst {dimension_numbers = #tpu.dot_dimension_numbers<[1], [0], [0], [1], [0, 0, 1, 1], [], []>} : vector<4x72xf32>, vector<72x256xf32>, vector<4x256xf32> -> vector<4x256xf32>
    %cst_34 = arith.constant 0.000000e+00 : f32
    %55 = vector.broadcast %cst_34 : f32 to vector<4x256xf32>
    %56 = arith.cmpf ogt, %54, %55 : vector<4x256xf32>
    %cst_35 = arith.constant 2.000000e-01 : f32
    %57 = vector.broadcast %cst_35 : f32 to vector<4x256xf32>
    %58 = arith.mulf %57, %54 : vector<4x256xf32>
    %59 = arith.select %56, %54, %58 : vector<4x256xi1>, vector<4x256xf32>
    %cst_36 = arith.constant dense<0.000000e+00> : vector<8x256xf32>
    %60 = tpu.matmul %21, %59, %cst_36 {dimension_numbers = #tpu.dot_dimension_numbers<[1], [0], [0], [1], [0, 0, 1, 1], [], []>} : vector<8x4xf32>, vector<4x256xf32>, vector<8x256xf32> -> vector<8x256xf32>
    %cst_37 = arith.constant 0.000000e+00 : f32
    %61 = vector.broadcast %cst_37 : f32 to vector<8x256xf32>
    %62 = arith.cmpf ogt, %60, %61 : vector<8x256xf32>
    %cst_38 = arith.constant 2.000000e-01 : f32
    %63 = vector.broadcast %cst_38 : f32 to vector<8x256xf32>
    %64 = arith.mulf %63, %60 : vector<8x256xf32>
    %65 = arith.select %62, %60, %64 : vector<8x256xi1>, vector<8x256xf32>
    %cst_39 = arith.constant dense<0.000000e+00> : vector<8xf32>
    %66 = vector.multi_reduction <add>, %65, %cst_39 [1] : vector<8x256xf32> to vector<8xf32>
    %67 = vector.shape_cast %66 : vector<8xf32> to vector<8x1xf32>
    %cst_40 = arith.constant 2.560000e+02 : f32
    %68 = vector.broadcast %cst_40 : f32 to vector<8x1xf32>
    %69 = arith.divf %67, %68 : vector<8x1xf32>
    %cst_41 = arith.constant dense<0.000000e+00> : vector<4x1xf32>
    %70 = tpu.matmul %22, %69, %cst_41 {dimension_numbers = #tpu.dot_dimension_numbers<[1], [0], [0], [1], [0, 0, 1, 1], [], []>} : vector<4x8xf32>, vector<8x1xf32>, vector<4x1xf32> -> vector<4x1xf32>
    %71 = arith.addf %70, %23 : vector<4x1xf32>
    %cst_42 = arith.constant 0.000000e+00 : f32
    %72 = vector.broadcast %cst_42 : f32 to vector<4x1xf32>
    %73 = arith.cmpf ogt, %71, %72 : vector<4x1xf32>
    %cst_43 = arith.constant 2.000000e-01 : f32
    %74 = vector.broadcast %cst_43 : f32 to vector<4x1xf32>
    %75 = arith.mulf %74, %71 : vector<4x1xf32>
    %76 = arith.select %73, %71, %75 : vector<4x1xi1>, vector<4x1xf32>
    %cst_44 = arith.constant dense<0.000000e+00> : vector<8x1xf32>
    %77 = tpu.matmul %24, %76, %cst_44 {dimension_numbers = #tpu.dot_dimension_numbers<[1], [0], [0], [1], [0, 0, 1, 1], [], []>} : vector<8x4xf32>, vector<4x1xf32>, vector<8x1xf32> -> vector<8x1xf32>
    %78 = arith.addf %77, %25 : vector<8x1xf32>
    %79 = tpu.transpose %78, [1, 0] : vector<8x1xf32> -> vector<1x8xf32>
    %80 = vector.broadcast %78 : vector<8x1xf32> to vector<8x8xf32>
    %81 = vector.broadcast %79 : vector<1x8xf32> to vector<8x8xf32>
    %82 = arith.mulf %80, %81 : vector<8x8xf32>
    %cst_45 = arith.constant dense<0xFF800000> : vector<8xf32>
    %83 = vector.multi_reduction <maximumf>, %82, %cst_45 [1] : vector<8x8xf32> to vector<8xf32>
    %84 = vector.shape_cast %83 : vector<8xf32> to vector<8x1xf32>
    %85 = vector.broadcast %84 : vector<8x1xf32> to vector<8x8xf32>
    %86 = arith.subf %82, %85 : vector<8x8xf32>
    %87 = math.exp %86 : vector<8x8xf32>
    %cst_46 = arith.constant dense<0.000000e+00> : vector<8xf32>
    %88 = vector.multi_reduction <add>, %87, %cst_46 [1] : vector<8x8xf32> to vector<8xf32>
    %89 = vector.shape_cast %88 : vector<8xf32> to vector<8x1xf32>
    %90 = vector.broadcast %89 : vector<8x1xf32> to vector<8x8xf32>
    %91 = arith.divf %87, %90 : vector<8x8xf32>
    %cst_47 = arith.constant dense<0.000000e+00> : vector<8x256xf32>
    %92 = tpu.matmul %91, %65, %cst_47 {dimension_numbers = #tpu.dot_dimension_numbers<[1], [0], [0], [1], [0, 0, 1, 1], [], []>} : vector<8x8xf32>, vector<8x256xf32>, vector<8x256xf32> -> vector<8x256xf32>
    %93 = arith.addf %65, %92 : vector<8x256xf32>
    %c0_48 = arith.constant 0 : index
    %c0_49 = arith.constant 0 : index
    %c0_50 = arith.constant 0 : index
    %94 = vector.load %arg4[%c0_48, %c0_49, %c0_50] : memref<1x8x256xf32, #tpu.memory_space<vmem>>, vector<1x8x256xf32>
    %95 = vector.shape_cast %94 : vector<1x8x256xf32> to vector<8x256xf32>
    %96 = vector.shape_cast %93 : vector<8x256xf32> to vector<1x8x256xf32>
    tpu.vector_store %arg4[%c0_48, %c0_49, %c0_50], %96 {strides = array<i32>} : memref<1x8x256xf32, #tpu.memory_space<vmem>>, vector<1x8x256xf32>,
    return
  }
  func.func @transform_0(%arg0: i32) -> (i32, i32, i32) {
    %c0_i32 = arith.constant 0 : i32
    %c0_i32_0 = arith.constant 0 : i32
    %c0_i32_1 = arith.constant 0 : i32
    return %arg0, %c0_i32, %c0_i32_0 : i32, i32, i32
  }
  func.func @transform_1(%arg0: i32) -> (i32, i32) {
    %c0_i32 = arith.constant 0 : i32
    %c0_i32_0 = arith.constant 0 : i32
    %c0_i32_1 = arith.constant 0 : i32
    return %c0_i32, %c0_i32_0 : i32, i32
  }
  func.func @transform_2(%arg0: i32) -> (i32, i32) {
    %c0_i32 = arith.constant 0 : i32
    %c0_i32_0 = arith.constant 0 : i32
    %c0_i32_1 = arith.constant 0 : i32
    return %c0_i32, %c0_i32_0 : i32, i32
  }
  func.func @transform_3(%arg0: i32) -> (i32, i32, i32) {
    %c0_i32 = arith.constant 0 : i32
    %c0_i32_0 = arith.constant 0 : i32
    %c0_i32_1 = arith.constant 0 : i32
    return %arg0, %c0_i32, %c0_i32_0 : i32, i32, i32
  }
}

</mosaic_0001>

<llo_original>
// kernel: tpu_custom_call.1
$region0: #{tpu_custom_call.1}
  #allocation0 [shape = 'u32[]', space=smem, size = 0x4, offset = 0x4, fixed_abs, tag = 'smem constant byte address 0x4 - core index']
  #allocation1 [shape = 'u32[144,128]{1,0:T(1,128)}', space=vmem, size = 0x12000, scoped, tag = 'internal scratch']
  #allocation2 [shape = 'f32[72,256]{1,0:T(8,128)}', space=vmem, size = 0x12000, scoped, tag = 'scratch operand']
  %s0 = inlined_call_operand.hbm [shape: f32[2,8,256], index: 0, kind: input, shape index: {}]
  %s1 = inlined_call_operand.hbm [shape: f32[40,128], index: 1, kind: input, shape index: {}]
  %s2 = inlined_call_operand.hbm [shape: s32[8,256], index: 2, kind: input, shape index: {}]
  %s3 = inlined_call_operand.hbm [shape: f32[2,8,256], index: 3, kind: output, shape index: {}]
  %s4 = sld [smem:[#allocation0]]
  $region57: #{tpu_custom_call.1} parent=0
    _
  %s6 = ssub.s32 1, %s4
  %s7 = scalar_select 0, %s6, %s4
  $region1: #{tpu_custom_call.1} parent=0
    #allocation3 [shape = 'u8[16384]{0}', space=vmem, size = 0x4000, scoped, tag = 'input window, operand 0']
    #allocation4 [shape = 's32[2]{0}', space=sflag, size = 0x8, scoped, tag = 'scoped memory for tpu_custom_call.1']
    #allocation5 [shape = 's32[2]{0}', space=sflag, size = 0x8, scoped, tag = 'scoped memory for tpu_custom_call.1']
    #allocation6 [shape = 'u8[20480]{0}', space=vmem, size = 0x5000, scoped, tag = 'input window, operand 1, single buffered']
    #allocation7 [shape = 's32[1]{0}', space=sflag, size = 0x4, scoped, tag = 'scoped memory for tpu_custom_call.1']
    #allocation8 [shape = 'u8[8192]{0}', space=vmem, size = 0x2000, scoped, tag = 'input window, operand 2, single buffered']
    #allocation9 [shape = 'u8[16384]{0}', space=vmem, size = 0x4000, scoped, tag = 'output window, operand 0']
    %8 = vsyncpa [#allocation4], 0
    %s9 = scalar_lea.sflag [#allocation4], 1
    %10 = vsyncpa %s9, 0
    %11 = vsyncpa [#allocation7], 0
    %12 = vsyncpa [#allocation5], 0
    %s13 = scalar_lea.sflag [#allocation5], 1
    %14 = vsyncpa %s13, 0
    loop: start=0, step=1, limit=4
    $region2: #{tpu_custom_call.1} parent=1 // loop_pre_header
      _
    $region3: #{tpu_custom_call.1} parent=1 // loop_header
      %s16 = sphi 0, %s20
      %p17 = scmp.ge.s32.totalorder %s16, 4
      %s26 = sphi 0, %s28
      %s29 = sphi 0, %s26
      %s30 = sphi 0, %s29
      %s46 = sphi 0, %s30
      %s50 = sphi 0, %s50
      %s52 = sphi 0, %s50
      %s53 = sphi 0, %s52
      %s67 = sphi 0, %s53
      %s71 = sphi 0, %s71
      %s73 = sphi 0, %s71
      %s74 = sphi 0, %s73
      %s88 = sphi 0, %s74
      %s94 = sphi 0, %s96
      %s97 = sphi 0, %s94
      %s98 = sphi 0, %s97
      %s114 = sphi 0, %s98
    $region4: #{tpu_custom_call.1} parent=1 // loop_header_branch
      %19 = sbr.rel (%p17) target = $region8
    $region5: #{tpu_custom_call.1} parent=1 // loop_body
      %s21 = ssub.s32 %s16, 1
      %s22 = ssub.s32 %s16, 2
      %s23 = sadd.s32 %s16, 1
      %s24 = ssub.s32 %s16, %s23
      %p25 = scmp.eq.s32.totalorder %s24, 0
      %s27 = sadd.s32 %s26, 1
      %s28 = scalar_select %p25, %s26, %s27
      %p31 = pneg %p25
      %p32 = scmp.eq.s32.totalorder %s16, 1
      %p33 = por %p31, %p32
      %p34 = scmp.ne.s32.totalorder %s26, %s29
      %p35 = scmp.eq.s32.totalorder %s16, 0
      %p36 = por %p34, %p35
      %p37 = scmp.ne.s32.totalorder %s26, %s29
      %p38 = scmp.eq.s32.totalorder %s21, 1
      %p39 = por %p37, %p38
      %p40 = scmp.ne.s32.totalorder %s29, %s30
      %p41 = scmp.eq.s32.totalorder %s21, 0
      %p42 = por %p40, %p41
      %p43 = scmp.ne.s32.totalorder %s29, %s30
      %p44 = scmp.eq.s32.totalorder %s22, 1
      %p45 = por %p43, %p44
      %p47 = scmp.ne.s32.totalorder %s30, %s46
      %p48 = scmp.eq.s32.totalorder %s22, 0
      %p49 = por %p47, %p48
      %s51 = sadd.s32 %s50, 1
      %p54 = scmp.eq.s32.totalorder %s16, 1
      %p55 = scmp.ne.s32.totalorder %s50, %s52
      %p56 = scmp.eq.s32.totalorder %s16, 0
      %p57 = por %p55, %p56
      %p58 = scmp.ne.s32.totalorder %s50, %s52
      %p59 = scmp.eq.s32.totalorder %s21, 1
      %p60 = por %p58, %p59
      %p61 = scmp.ne.s32.totalorder %s52, %s53
      %p62 = scmp.eq.s32.totalorder %s21, 0
      %p63 = por %p61, %p62
      %p64 = scmp.ne.s32.totalorder %s52, %s53
      %p65 = scmp.eq.s32.totalorder %s22, 1
      %p66 = por %p64, %p65
      %p68 = scmp.ne.s32.totalorder %s53, %s67
      %p69 = scmp.eq.s32.totalorder %s22, 0
      %p70 = por %p68, %p69
      %s72 = sadd.s32 %s71, 1
      %p75 = scmp.eq.s32.totalorder %s16, 1
      %p76 = scmp.ne.s32.totalorder %s71, %s73
      %p77 = scmp.eq.s32.totalorder %s16, 0
      %p78 = por %p76, %p77
      %p79 = scmp.ne.s32.totalorder %s71, %s73
      %p80 = scmp.eq.s32.totalorder %s21, 1
      %p81 = por %p79, %p80
      %p82 = scmp.ne.s32.totalorder %s73, %s74
      %p83 = scmp.eq.s32.totalorder %s21, 0
      %p84 = por %p82, %p83
      %p85 = scmp.ne.s32.totalorder %s73, %s74
      %p86 = scmp.eq.s32.totalorder %s22, 1
      %p87 = por %p85, %p86
      %p89 = scmp.ne.s32.totalorder %s74, %s88
      %p90 = scmp.eq.s32.totalorder %s22, 0
      %p91 = por %p89, %p90
      %s92 = ssub.s32 %s16, %s23
      %p93 = scmp.eq.s32.totalorder %s92, 0
      %s95 = sadd.s32 %s94, 1
      %s96 = scalar_select %p93, %s94, %s95
      %p99 = pneg %p93
      %p100 = scmp.eq.s32.totalorder %s16, 1
      %p101 = por %p99, %p100
      %p102 = scmp.ne.s32.totalorder %s94, %s97
      %p103 = scmp.eq.s32.totalorder %s16, 0
      %p104 = por %p102, %p103
      %p105 = scmp.ne.s32.totalorder %s94, %s97
      %p106 = scmp.eq.s32.totalorder %s21, 1
      %p107 = por %p105, %p106
      %p108 = scmp.ne.s32.totalorder %s97, %s98
      %p109 = scmp.eq.s32.totalorder %s21, 0
      %p110 = por %p108, %p109
      %p111 = scmp.ne.s32.totalorder %s97, %s98
      %p112 = scmp.eq.s32.totalorder %s22, 1
      %p113 = por %p111, %p112
      %p115 = scmp.ne.s32.totalorder %s98, %s114
      %p116 = scmp.eq.s32.totalorder %s22, 0
      %p117 = por %p115, %p116
      %p118 = scmp.le.s32.totalorder 1, %s16
      %p119 = scmp.lt.s32.totalorder %s16, 3
      %p120 = pnand %p118, %p119
      %p121 = pneg %p120
      // Predicated region
      $region9: #{tpu_custom_call.1} parent=5 // pred_check
        _
      $region10: #{tpu_custom_call.1} parent=5 // pred_check_branch
        %123 = sbr.rel (%p120) target = $region12
      $region11: #{tpu_custom_call.1} parent=5 // pred_region
        %s124 = ssub.s32 %s16, 1
        // Predicated region
        $region13: #{tpu_custom_call.1} parent=11 // pred_check
          %p125 = pneg %p63
        $region14: #{tpu_custom_call.1} parent=11 // pred_check_branch
          %127 = sbr.rel (%p125) target = $region16
        $region15: #{tpu_custom_call.1} parent=11 // pred_region
          %s129 = ssub.s32 640, 640
          %130 = vsyncadd [#allocation7], %s129
          %s131 = sshll.u32 [#allocation6], 4
          %s132 = int_to_ptr.vmem [resolvable:$true] %s131
          %137 = dma.hbm_to_vmem [thread:$0]  %s1, 640, %s132, [#allocation7], 128, 128, 8
        $region16: #{tpu_custom_call.1} parent=11 // pred_fallthru
          _
        // Predicated region
        $region17: #{tpu_custom_call.1} parent=11 // pred_check
          %p138 = pneg %p84
        $region18: #{tpu_custom_call.1} parent=11 // pred_check_branch
          %140 = sbr.rel (%p138) target = $region20
        $region19: #{tpu_custom_call.1} parent=11 // pred_region
          %s142 = ssub.s32 256, 256
          %143 = vsyncadd [#allocation7], %s142
          %s145 = sshll.u32 [#allocation8], 4
          %s146 = int_to_ptr.vmem [resolvable:$true] %s145
          %148 = dma.hbm_to_vmem [thread:$0]  %s2, 256, %s146, [#allocation7]
        $region20: #{tpu_custom_call.1} parent=11 // pred_fallthru
          _
      $region12: #{tpu_custom_call.1} parent=5 // pred_fallthru
        _
      %p149 = scmp.lt.s32.totalorder %s16, 2
      // Predicated region
      $region21: #{tpu_custom_call.1} parent=5 // pred_check
        %p150 = pneg %p149
      $region22: #{tpu_custom_call.1} parent=5 // pred_check_branch
        %152 = sbr.rel (%p150) target = $region24
      $region23: #{tpu_custom_call.1} parent=5 // pred_region
        // Predicated region
        $region25: #{tpu_custom_call.1} parent=23 // pred_check
          %p153 = pneg %p36
        $region26: #{tpu_custom_call.1} parent=23 // pred_check_branch
          %155 = sbr.rel (%p153) target = $region28
        $region27: #{tpu_custom_call.1} parent=23 // pred_region
          %s156 = sand.u32 %s26, 1
          %s157 = scalar_lea.sflag [#allocation4], %s156
          %s158 = sand.u32 %s26, 1
          %s159 = smul.addr %s158, 16
          %s160 = scalar_lea.vmem [#allocation3], %s159
          %s162 = ssub.s32 256, 256
          %163 = vsyncadd %s157, %s162
          %s164 = smul.addr %s16, 2
          %s165 = smul.addr %s164, 128
          %s166 = scalar_lea.hbm %s0, %s165
          %s168 = sshll.u32 %s160, 4
          %s169 = int_to_ptr.vmem [resolvable:$true] %s168
          %171 = dma.hbm_to_vmem [thread:$0]  %s166, 256, %s169, %s157
        $region28: #{tpu_custom_call.1} parent=23 // pred_fallthru
          _
      $region24: #{tpu_custom_call.1} parent=5 // pred_fallthru
        _
      %p172 = scmp.le.s32.totalorder 1, %s16
      %p173 = scmp.lt.s32.totalorder %s16, 3
      %p174 = pnand %p172, %p173
      %p175 = pneg %p174
      // Predicated region
      $region29: #{tpu_custom_call.1} parent=5 // pred_check
        _
      $region30: #{tpu_custom_call.1} parent=5 // pred_check_branch
        %177 = sbr.rel (%p174) target = $region32
      $region31: #{tpu_custom_call.1} parent=5 // pred_region
        %s178 = ssub.s32 %s16, 1
        %s179 = sand.u32 %s29, 1
        %s180 = scalar_lea.sflag [#allocation4], %s179
        %s181 = sand.u32 %s29, 1
        %s182 = smul.addr %s181, 16
        %s183 = scalar_lea.vmem [#allocation3], %s182
        // Predicated region
        $region33: #{tpu_custom_call.1} parent=31 // pred_check
          %p184 = pneg %p42
        $region34: #{tpu_custom_call.1} parent=31 // pred_check_branch
          %186 = sbr.rel (%p184) target = $region36
        $region35: #{tpu_custom_call.1} parent=31 // pred_region
          %187 = dma.done %s180, 256
        $region36: #{tpu_custom_call.1} parent=31 // pred_fallthru
          _
        // Predicated region
        $region37: #{tpu_custom_call.1} parent=31 // pred_check
          %p188 = pneg %p63
        $region38: #{tpu_custom_call.1} parent=31 // pred_check_branch
          %190 = sbr.rel (%p188) target = $region40
        $region39: #{tpu_custom_call.1} parent=31 // pred_region
          %191 = dma.done [#allocation7], 640
        $region40: #{tpu_custom_call.1} parent=31 // pred_fallthru
          _
        // Predicated region
        $region41: #{tpu_custom_call.1} parent=31 // pred_check
          %p192 = pneg %p84
        $region42: #{tpu_custom_call.1} parent=31 // pred_check_branch
          %194 = sbr.rel (%p192) target = $region44
        $region43: #{tpu_custom_call.1} parent=31 // pred_region
          %195 = dma.done [#allocation7], 256
        $region44: #{tpu_custom_call.1} parent=31 // pred_fallthru
          _
        %s196 = sand.u32 %s29, 1
        %s197 = scalar_lea.sflag [#allocation4], %s196
        %s198 = sand.u32 %s29, 1
        %s199 = smul.addr %s198, 16
        %s200 = scalar_lea.vmem [#allocation3], %s199
        %p201 = pneg %p42
        %p202 = pneg %p39
        %p203 = pneg %p63
        %p204 = pneg %p60
        %p205 = pneg %p84
        %p206 = pneg %p81
        %p207 = pneg %p110
        %p208 = pneg %p107
        %s209 = sand.u32 %s97, 1
        %s210 = scalar_lea.sflag [#allocation5], %s209
        %s211 = sand.u32 %s97, 1
        %s212 = smul.addr %s211, 16
        %s213 = scalar_lea.vmem [#allocation9], %s212
        %v214 = vld [vmem:[#allocation8] ss:$8 sm:$0x3]
        %vm215 = vcmp.ne.s32.totalorder %v214, 0
        %v216 = vsel %vm215, 1, 0
        %v217 = vlaneseq
        %v218 = vshrl.u32 %v217, 7
        %v219 = vsub.s32 0, %v218
        %v220 = vrot.slane %v216, %v219
        %v221 = vlaneseq
        %v222 = vshrl.u32 %v221, 7
        %v223 = vsub.s32 1, %v222
        %v224 = vrot.slane %v216, %v223
        %vm225 = vcmp.eq.s32.totalorder %v220, 1
        %vm226 = vcmp.eq.s32.totalorder %v224, 1
        %s227 = scalar_lea.vmem [#allocation8], 1
        %v228 = vld [vmem:[%s227] ss:$8 sm:$0x3]
        %vm229 = vcmp.ne.s32.totalorder %v228, 0
        %v230 = vsel %vm229, 1, 0
        %v231 = vlaneseq
        %v232 = vshrl.u32 %v231, 7
        %v233 = vsub.s32 0, %v232
        %v234 = vrot.slane %v230, %v233
        %v235 = vlaneseq
        %v236 = vshrl.u32 %v235, 7
        %v237 = vsub.s32 1, %v236
        %v238 = vrot.slane %v230, %v237
        %vm239 = vcmp.eq.s32.totalorder %v234, 1
        %vm240 = vcmp.eq.s32.totalorder %v238, 1
        %s241 = scalar_lea.vmem [#allocation8], 2
        %v242 = vld [vmem:[%s241] ss:$8 sm:$0x3]
        %vm243 = vcmp.ne.s32.totalorder %v242, 0
        %v244 = vsel %vm243, 1, 0
        %v245 = vlaneseq
        %v246 = vshrl.u32 %v245, 7
        %v247 = vsub.s32 0, %v246
        %v248 = vrot.slane %v244, %v247
        %v249 = vlaneseq
        %v250 = vshrl.u32 %v249, 7
        %v251 = vsub.s32 1, %v250
        %v252 = vrot.slane %v244, %v251
        %vm253 = vcmp.eq.s32.totalorder %v248, 1
        %vm254 = vcmp.eq.s32.totalorder %v252, 1
        %s255 = scalar_lea.vmem [#allocation8], 3
        %v256 = vld [vmem:[%s255] ss:$8 sm:$0x3]
        %vm257 = vcmp.ne.s32.totalorder %v256, 0
        %v258 = vsel %vm257, 1, 0
        %v259 = vlaneseq
        %v260 = vshrl.u32 %v259, 7
        %v261 = vsub.s32 0, %v260
        %v262 = vrot.slane %v258, %v261
        %v263 = vlaneseq
        %v264 = vshrl.u32 %v263, 7
        %v265 = vsub.s32 1, %v264
        %v266 = vrot.slane %v258, %v265
        %vm267 = vcmp.eq.s32.totalorder %v262, 1
        %vm268 = vcmp.eq.s32.totalorder %v266, 1
        %v269 = vld [vmem:[#allocation6] sm:$0xf]
        %v270 = vld [vmem:[#allocation6 + $0x4] sm:$0xff]
        %v271 = vld [vmem:[#allocation6 + $0xc] sm:$0xf]
        %v272 = vld [vmem:[#allocation6 + $0x10] sm:$0xf]
        %v273 = vld [vmem:[#allocation6 + $0x14] sm:$0xff]
        %v274 = vld [vmem:[#allocation6 + $0x1c] sm:$0xff]
        %v275 = vld [vmem:[%s183] sm:$0xff]
        %v276 = vld [vmem:[%s183 + $0x8] sm:$0xff]
        %277 = vrot.lane.b32.xlu0 %v275, 16
        %v278 = vpop.permute.xlu0 %277
        %279 = vrot.lane.b32.xlu0 %v276, 16
        %v280 = vpop.permute.xlu0 %279
        %v281 = vlaneseq
        %v282 = vand.u32 %v281, 127
        %vm283 = vcmp.lt.s32.totalorder %v282, 16
        %v284 = vsel %vm283, %v278, %v280
        %v285 = vsel %vm283, %v280, %v278
        %286 = vrot.lane.b32.xlu0 %v275, 112
        %v287 = vpop.permute.xlu0 %286
        %288 = vrot.lane.b32.xlu0 %v276, 112
        %v289 = vpop.permute.xlu0 %288
        %vm290 = vcmp.lt.s32.totalorder %v282, 112
        %v291 = vsel %vm290, %v287, %v289
        %v292 = vsel %vm290, %v289, %v287
        %v293 = vsel %vm225, %v291, %v285
        %v294 = vsel %vm226, %v292, %v284
        %v295 = vsel %vm239, %v285, %v291
        %v296 = vsel %vm240, %v284, %v292
        %297 = vrot.lane.b32.xlu0 %v293, 1
        %v298 = vpop.permute.xlu0 %297
        %299 = vrot.lane.b32.xlu0 %v294, 1
        %v300 = vpop.permute.xlu0 %299
        %vm301 = vcmp.lt.s32.totalorder %v282, 1
        %v302 = vsel %vm301, %v298, %v300
        %v303 = vsel %vm301, %v300, %v298
        %304 = vrot.lane.b32.xlu0 %v293, 127
        %v305 = vpop.permute.xlu0 %304
        %306 = vrot.lane.b32.xlu0 %v294, 127
        %v307 = vpop.permute.xlu0 %306
        %vm308 = vcmp.lt.s32.totalorder %v282, 127
        %v309 = vsel %vm308, %v305, %v307
        %v310 = vsel %vm308, %v307, %v305
        %v311 = vsel %vm253, %v309, %v303
        %v312 = vsel %vm254, %v310, %v302
        %v313 = vsel %vm267, %v303, %v309
        %v314 = vsel %vm268, %v302, %v310
        %315 = vst [vmem:[#allocation2] sm:$0xff] %v311
        %316 = vst [vmem:[#allocation2 + $0x8] sm:$0xff] %v312
        %317 = vst [vmem:[#allocation2 + $0x10] sm:$0xff] %v293
        %318 = vst [vmem:[#allocation2 + $0x18] sm:$0xff] %v294
        %319 = vst [vmem:[#allocation2 + $0x20] sm:$0xff] %v313
        %320 = vst [vmem:[#allocation2 + $0x28] sm:$0xff] %v314
        %321 = vrot.lane.b32.xlu0 %v275, 1
        %v322 = vpop.permute.xlu0 %321
        %323 = vrot.lane.b32.xlu0 %v276, 1
        %v324 = vpop.permute.xlu0 %323
        %v325 = vsel %vm301, %v322, %v324
        %v326 = vsel %vm301, %v324, %v322
        %327 = vrot.lane.b32.xlu0 %v275, 127
        %v328 = vpop.permute.xlu0 %327
        %329 = vrot.lane.b32.xlu0 %v276, 127
        %v330 = vpop.permute.xlu0 %329
        %v331 = vsel %vm308, %v328, %v330
        %v332 = vsel %vm308, %v330, %v328
        %v333 = vsel %vm253, %v331, %v326
        %v334 = vsel %vm254, %v332, %v325
        %v335 = vsel %vm267, %v326, %v331
        %v336 = vsel %vm268, %v325, %v332
        %337 = vst [vmem:[#allocation2 + $0x30] sm:$0xff] %v333
        %338 = vst [vmem:[#allocation2 + $0x38] sm:$0xff] %v334
        %339 = vst [vmem:[#allocation2 + $0x40] sm:$0xff] %v275
        %340 = vst [vmem:[#allocation2 + $0x48] sm:$0xff] %v276
        %341 = vst [vmem:[#allocation2 + $0x50] sm:$0xff] %v335
        %342 = vst [vmem:[#allocation2 + $0x58] sm:$0xff] %v336
        %343 = vrot.lane.b32.xlu0 %v295, 1
        %v344 = vpop.permute.xlu0 %343
        %345 = vrot.lane.b32.xlu0 %v296, 1
        %v346 = vpop.permute.xlu0 %345
        %v347 = vsel %vm301, %v344, %v346
        %v348 = vsel %vm301, %v346, %v344
        %349 = vrot.lane.b32.xlu0 %v295, 127
        %v350 = vpop.permute.xlu0 %349
        %351 = vrot.lane.b32.xlu0 %v296, 127
        %v352 = vpop.permute.xlu0 %351
        %v353 = vsel %vm308, %v350, %v352
        %v354 = vsel %vm308, %v352, %v350
        %v355 = vsel %vm253, %v353, %v348
        %v356 = vsel %vm254, %v354, %v347
        %v357 = vsel %vm267, %v348, %v353
        %v358 = vsel %vm268, %v347, %v354
        %359 = vst [vmem:[#allocation2 + $0x60] sm:$0xff] %v355
        %360 = vst [vmem:[#allocation2 + $0x68] sm:$0xff] %v356
        %361 = vst [vmem:[#allocation2 + $0x70] sm:$0xff] %v295
        %362 = vst [vmem:[#allocation2 + $0x78] sm:$0xff] %v296
        %363 = vst [vmem:[#allocation2 + $0x80] sm:$0xff] %v357
        %364 = vst [vmem:[#allocation2 + $0x88] sm:$0xff] %v358
        %v365 = vld [vmem:[#allocation2] sm:$0xff]
        %v366 = vld [vmem:[#allocation2 + $0x8] sm:$0xff]
        %v367 = vld [vmem:[#allocation2 + $0x10] sm:$0xff]
        %v368 = vld [vmem:[#allocation2 + $0x18] sm:$0xff]
        %v369 = vld [vmem:[#allocation2 + $0x20] sm:$0xff]
        %v370 = vld [vmem:[#allocation2 + $0x28] sm:$0xff]
        %v371 = vld [vmem:[#allocation2 + $0x30] sm:$0xff]
        %v372 = vld [vmem:[#allocation2 + $0x38] sm:$0xff]
        %v373 = vld [vmem:[#allocation2 + $0x40] sm:$0xff]
        %v374 = vld [vmem:[#allocation2 + $0x48] sm:$0xff]
        %v375 = vld [vmem:[#allocation2 + $0x50] sm:$0xff]
        %v376 = vld [vmem:[#allocation2 + $0x58] sm:$0xff]
        %v377 = vld [vmem:[#allocation2 + $0x60] sm:$0xff]
        %v378 = vld [vmem:[#allocation2 + $0x68] sm:$0xff]
        %v379 = vld [vmem:[#allocation2 + $0x70] sm:$0xff]
        %v380 = vld [vmem:[#allocation2 + $0x78] sm:$0xff]
        %v381 = vld [vmem:[#allocation2 + $0x80] sm:$0xff]
        %v382 = vld [vmem:[#allocation2 + $0x88] sm:$0xff]
        %vm383 = vcmask 588800
        %v385 = vsel %vm383, %v269, 0
        %387 = vmatprep.subr.mxu0 %v366
        %388 = vmatpush1.msra.mxu0 %v365
        %389 = vmatprep.subr.mxu0 %v368
        %390 = vmatpush1.msra.mxu0 %v367
        %391 = vmatprep.subr.mxu0 %v370
        %392 = vmatpush1.msra.mxu0 %v369
        %393 = vmatprep.subr.mxu0 %v372
        %394 = vmatpush1.msra.mxu0 %v371
        %395 = vmatprep.subr.mxu0 %v374
        %396 = vmatpush1.msra.mxu0 %v373
        %397 = vmatprep.subr.mxu0 %v376
        %398 = vmatpush1.msra.mxu0 %v375
        %399 = vmatprep.subr.mxu0 %v378
        %400 = vmatpush1.msra.mxu0 %v377
        %401 = vmatprep.subr.mxu0 %v380
        %402 = vmatpush1.msra.mxu0 %v379
        %403 = vmatprep.subr.mxu0 %v382
        %404 = vmatpush1.msra.mxu0 %v381
        %405 = vmatprep.subr.mxu0 0.0
        %406 = vmatpush1.msra.mxu0 0.0
        %407 = vmatprep.subr.mxu0 0.0
        %408 = vmatpush1.msra.mxu0 0.0
        %409 = vmatprep.subr.mxu0 0.0
        %410 = vmatpush1.msra.mxu0 0.0
        %411 = vmatprep.subr.mxu0 0.0
        %412 = vmatpush1.msra.mxu0 0.0
        %413 = vmatprep.subr.mxu0 0.0
        %414 = vmatpush1.msra.mxu0 0.0
        %415 = vmatprep.subr.mxu0 0.0
        %416 = vmatpush1.msra.mxu0 0.0
        %417 = vmatprep.subr.mxu0 0.0
        %418 = vmatpush1.msra.mxu0 0.0
        %419 = vmatprep.subr.mxu0 0.0
        %420 = vmatpush1.msra.mxu0 0.0
        %421 = vmatprep.subr.mxu0 0.0
        %422 = vmatpush1.msra.mxu0 0.0
        %423 = vmatprep.subr.mxu0 0.0
        %424 = vmatpush1.msra.mxu0 0.0
        %425 = vmatprep.subr.mxu0 0.0
        %426 = vmatpush1.msra.mxu0 0.0
        %427 = vmatprep.subr.mxu0 0.0
        %428 = vmatpush1.msra.mxu0 0.0
        %429 = vmatprep.subr.mxu0 0.0
        %430 = vmatpush1.msra.mxu0 0.0
        %431 = vmatprep.subr.mxu0 0.0
        %432 = vmatpush1.msra.mxu0 0.0
        %433 = vmatprep.subr.mxu0 0.0
        %434 = vmatpush1.msra.mxu0 0.0
        %435 = vmatprep.subr.mxu0 0.0
        %436 = vmatpush1.msra.mxu0 0.0
        %437 = vmatprep.subr.mxu0 0.0
        %438 = vmatpush1.msra.mxu0 0.0
        %439 = vmatprep.subr.mxu0 0.0
        %440 = vmatpush1.msra.mxu0 0.0
        %441 = vmatprep.subr.mxu0 0.0
        %442 = vmatpush1.msra.mxu0 0.0
        %443 = vmatprep.subr.mxu0 0.0
        %444 = vmatpush1.msra.mxu0 0.0
        %445 = vmatprep.subr.mxu0 0.0
        %446 = vmatpush1.msra.mxu0 0.0
        %447 = vmatprep.subr.mxu0 0.0
        %448 = vmatpush1.msra.mxu0 0.0
        %449 = vmatprep.subr.mxu0 0.0
        %450 = vmatpush1.msra.mxu0 0.0
        %451 = vmatprep.mubr.f32.mxu0 0.0
        %452 = vmatmul.mubr.f32.gmra.mrb[0].mxu0 %v385
        %v453 = vpop.f32.mrb[0].mxu0
        %v454 = vadd.f32 0.0, %v453
        %v455 = vpop.f32.mrb[0].mxu0
        %v456 = vadd.f32 0.0, %v455
        %457 = vdwg.mxu0
        %vm458 = vcmp.gt.f32.partialorder %v454, 0.0
        %vm459 = vcmp.gt.f32.partialorder %v456, 0.0
        %v460 = vmul.f32 %v454, 0.2
        %v461 = vmul.f32 %v456, 0.2
        %v462 = vsel %vm458, %v454, %v460
        %v463 = vsel %vm459, %v456, %v461
        %vm464 = vcmask 31744
        %v466 = vsel %vm464, %v270, 0
        %vm468 = vcmask 1043456
        %v470 = vsel %vm468, %v462, 0
        %v473 = vsel %vm468, %v463, 0
        %475 = vmatprep.subr.mxu0 %v473
        %476 = vmatpush1.msra.mxu0 %v470
        %477 = vmatprep.subr.mxu0 0.0
        %478 = vmatpush1.msra.mxu0 0.0
        %479 = vmatprep.subr.mxu0 0.0
        %480 = vmatpush1.msra.mxu0 0.0
        %481 = vmatprep.subr.mxu0 0.0
        %482 = vmatpush1.msra.mxu0 0.0
        %483 = vmatprep.subr.mxu0 0.0
        %484 = vmatpush1.msra.mxu0 0.0
        %485 = vmatprep.subr.mxu0 0.0
        %486 = vmatpush1.msra.mxu0 0.0
        %487 = vmatprep.subr.mxu0 0.0
        %488 = vmatpush1.msra.mxu0 0.0
        %489 = vmatprep.subr.mxu0 0.0
        %490 = vmatpush1.msra.mxu0 0.0
        %491 = vmatprep.subr.mxu0 0.0
        %492 = vmatpush1.msra.mxu0 0.0
        %493 = vmatprep.subr.mxu0 0.0
        %494 = vmatpush1.msra.mxu0 0.0
        %495 = vmatprep.subr.mxu0 0.0
        %496 = vmatpush1.msra.mxu0 0.0
        %497 = vmatprep.subr.mxu0 0.0
        %498 = vmatpush1.msra.mxu0 0.0
        %499 = vmatprep.subr.mxu0 0.0
        %500 = vmatpush1.msra.mxu0 0.0
        %501 = vmatprep.subr.mxu0 0.0
        %502 = vmatpush1.msra.mxu0 0.0
        %503 = vmatprep.subr.mxu0 0.0
        %504 = vmatpush1.msra.mxu0 0.0
        %505 = vmatprep.subr.mxu0 0.0
        %506 = vmatpush1.msra.mxu0 0.0
        %507 = vmatprep.subr.mxu0 0.0
        %508 = vmatpush1.msra.mxu0 0.0
        %509 = vmatprep.subr.mxu0 0.0
        %510 = vmatpush1.msra.mxu0 0.0
        %511 = vmatprep.subr.mxu0 0.0
        %512 = vmatpush1.msra.mxu0 0.0
        %513 = vmatprep.subr.mxu0 0.0
        %514 = vmatpush1.msra.mxu0 0.0
        %515 = vmatprep.subr.mxu0 0.0
        %516 = vmatpush1.msra.mxu0 0.0
        %517 = vmatprep.subr.mxu0 0.0
        %518 = vmatpush1.msra.mxu0 0.0
        %519 = vmatprep.subr.mxu0 0.0
        %520 = vmatpush1.msra.mxu0 0.0
        %521 = vmatprep.subr.mxu0 0.0
        %522 = vmatpush1.msra.mxu0 0.0
        %523 = vmatprep.subr.mxu0 0.0
        %524 = vmatpush1.msra.mxu0 0.0
        %525 = vmatprep.subr.mxu0 0.0
        %526 = vmatpush1.msra.mxu0 0.0
        %527 = vmatprep.subr.mxu0 0.0
        %528 = vmatpush1.msra.mxu0 0.0
        %529 = vmatprep.subr.mxu0 0.0
        %530 = vmatpush1.msra.mxu0 0.0
        %531 = vmatprep.subr.mxu0 0.0
        %532 = vmatpush1.msra.mxu0 0.0
        %533 = vmatprep.subr.mxu0 0.0
        %534 = vmatpush1.msra.mxu0 0.0
        %535 = vmatprep.subr.mxu0 0.0
        %536 = vmatpush1.msra.mxu0 0.0
        %537 = vmatprep.subr.mxu0 0.0
        %538 = vmatpush1.msra.mxu0 0.0
        %539 = vmatprep.mubr.f32.mxu0 0.0
        %540 = vmatmul.mubr.f32.gmra.mrb[0].mxu0 %v466
        %v541 = vpop.f32.mrb[0].mxu0
        %v542 = vadd.f32 0.0, %v541
        %v543 = vpop.f32.mrb[0].mxu0
        %v544 = vadd.f32 0.0, %v543
        %545 = vdwg.mxu0
        %vm546 = vcmp.gt.f32.partialorder %v542, 0.0
        %vm547 = vcmp.gt.f32.partialorder %v544, 0.0
        %v548 = vmul.f32 %v542, 0.2
        %v549 = vmul.f32 %v544, 0.2
        %v550 = vsel %vm546, %v542, %v548
        %v551 = vsel %vm547, %v544, %v549
        %v552 = vadd.f32 %v550, %v551
        %553 = vadd.xlane.f32.xlu0 %v552
        %v554 = vpop.xlane.xlu0 %553
        %v555 = vrcp.pop 256.0
        %v556 = vmul.f32 %v554, %v555
        %vm557 = vcmask 64512
        %v559 = vsel %vm557, %v271, 0
        %561 = vmatprep.subr.mxu0 0.0
        %562 = vmatpush1.msra.mxu0 %v556
        %563 = vmatprep.subr.mxu0 0.0
        %564 = vmatpush1.msra.mxu0 0.0
        %565 = vmatprep.subr.mxu0 0.0
        %566 = vmatpush1.msra.mxu0 0.0
        %567 = vmatprep.subr.mxu0 0.0
        %568 = vmatpush1.msra.mxu0 0.0
        %569 = vmatprep.subr.mxu0 0.0
        %570 = vmatpush1.msra.mxu0 0.0
        %571 = vmatprep.subr.mxu0 0.0
        %572 = vmatpush1.msra.mxu0 0.0
        %573 = vmatprep.subr.mxu0 0.0
        %574 = vmatpush1.msra.mxu0 0.0
        %575 = vmatprep.subr.mxu0 0.0
        %576 = vmatpush1.msra.mxu0 0.0
        %577 = vmatprep.subr.mxu0 0.0
        %578 = vmatpush1.msra.mxu0 0.0
        %579 = vmatprep.subr.mxu0 0.0
        %580 = vmatpush1.msra.mxu0 0.0
        %581 = vmatprep.subr.mxu0 0.0
        %582 = vmatpush1.msra.mxu0 0.0
        %583 = vmatprep.subr.mxu0 0.0
        %584 = vmatpush1.msra.mxu0 0.0
        %585 = vmatprep.subr.mxu0 0.0
        %586 = vmatpush1.msra.mxu0 0.0
        %587 = vmatprep.subr.mxu0 0.0
        %588 = vmatpush1.msra.mxu0 0.0
        %589 = vmatprep.subr.mxu0 0.0
        %590 = vmatpush1.msra.mxu0 0.0
        %591 = vmatprep.subr.mxu0 0.0
        %592 = vmatpush1.msra.mxu0 0.0
        %593 = vmatprep.subr.mxu0 0.0
        %594 = vmatpush1.msra.mxu0 0.0
        %595 = vmatprep.subr.mxu0 0.0
        %596 = vmatpush1.msra.mxu0 0.0
        %597 = vmatprep.subr.mxu0 0.0
        %598 = vmatpush1.msra.mxu0 0.0
        %599 = vmatprep.subr.mxu0 0.0
        %600 = vmatpush1.msra.mxu0 0.0
        %601 = vmatprep.subr.mxu0 0.0
        %602 = vmatpush1.msra.mxu0 0.0
        %603 = vmatprep.subr.mxu0 0.0
        %604 = vmatpush1.msra.mxu0 0.0
        %605 = vmatprep.subr.mxu0 0.0
        %606 = vmatpush1.msra.mxu0 0.0
        %607 = vmatprep.subr.mxu0 0.0
        %608 = vmatpush1.msra.mxu0 0.0
        %609 = vmatprep.subr.mxu0 0.0
        %610 = vmatpush1.msra.mxu0 0.0
        %611 = vmatprep.subr.mxu0 0.0
        %612 = vmatpush1.msra.mxu0 0.0
        %613 = vmatprep.subr.mxu0 0.0
        %614 = vmatpush1.msra.mxu0 0.0
        %615 = vmatprep.subr.mxu0 0.0
        %616 = vmatpush1.msra.mxu0 0.0
        %617 = vmatprep.subr.mxu0 0.0
        %618 = vmatpush1.msra.mxu0 0.0
        %619 = vmatprep.subr.mxu0 0.0
        %620 = vmatpush1.msra.mxu0 0.0
        %621 = vmatprep.subr.mxu0 0.0
        %622 = vmatpush1.msra.mxu0 0.0
        %623 = vmatprep.subr.mxu0 0.0
        %624 = vmatpush1.msra.mxu0 0.0
        %625 = vmatprep.mubr.f32.mxu0 0.0
        %626 = vmatmul.mubr.f32.gmra.mrb[0].mxu0 %v559
        %v627 = vpop.f32.mrb[0].mxu0
        %v628 = vadd.f32 %v272, %v627
        %v629 = vpop.f32.mrb[0].mxu0
        %630 = vdwg.mxu0
        %vm631 = vcmp.gt.f32.partialorder %v628, 0.0
        %v632 = vmul.f32 %v628, 0.2
        %v633 = vsel %vm631, %v628, %v632
        %v635 = vsel %vm464, %v273, 0
        %v638 = vsel %vm468, %v633, 0
        %640 = vmatprep.subr.mxu0 0.0
        %641 = vmatpush1.msra.mxu0 %v638
        %642 = vmatprep.subr.mxu0 0.0
        %643 = vmatpush1.msra.mxu0 0.0
        %644 = vmatprep.subr.mxu0 0.0
        %645 = vmatpush1.msra.mxu0 0.0
        %646 = vmatprep.subr.mxu0 0.0
        %647 = vmatpush1.msra.mxu0 0.0
        %648 = vmatprep.subr.mxu0 0.0
        %649 = vmatpush1.msra.mxu0 0.0
        %650 = vmatprep.subr.mxu0 0.0
        %651 = vmatpush1.msra.mxu0 0.0
        %652 = vmatprep.subr.mxu0 0.0
        %653 = vmatpush1.msra.mxu0 0.0
        %654 = vmatprep.subr.mxu0 0.0
        %655 = vmatpush1.msra.mxu0 0.0
        %656 = vmatprep.subr.mxu0 0.0
        %657 = vmatpush1.msra.mxu0 0.0
        %658 = vmatprep.subr.mxu0 0.0
        %659 = vmatpush1.msra.mxu0 0.0
        %660 = vmatprep.subr.mxu0 0.0
        %661 = vmatpush1.msra.mxu0 0.0
        %662 = vmatprep.subr.mxu0 0.0
        %663 = vmatpush1.msra.mxu0 0.0
        %664 = vmatprep.subr.mxu0 0.0
        %665 = vmatpush1.msra.mxu0 0.0
        %666 = vmatprep.subr.mxu0 0.0
        %667 = vmatpush1.msra.mxu0 0.0
        %668 = vmatprep.subr.mxu0 0.0
        %669 = vmatpush1.msra.mxu0 0.0
        %670 = vmatprep.subr.mxu0 0.0
        %671 = vmatpush1.msra.mxu0 0.0
        %672 = vmatprep.subr.mxu0 0.0
        %673 = vmatpush1.msra.mxu0 0.0
        %674 = vmatprep.subr.mxu0 0.0
        %675 = vmatpush1.msra.mxu0 0.0
        %676 = vmatprep.subr.mxu0 0.0
        %677 = vmatpush1.msra.mxu0 0.0
        %678 = vmatprep.subr.mxu0 0.0
        %679 = vmatpush1.msra.mxu0 0.0
        %680 = vmatprep.subr.mxu0 0.0
        %681 = vmatpush1.msra.mxu0 0.0
        %682 = vmatprep.subr.mxu0 0.0
        %683 = vmatpush1.msra.mxu0 0.0
        %684 = vmatprep.subr.mxu0 0.0
        %685 = vmatpush1.msra.mxu0 0.0
        %686 = vmatprep.subr.mxu0 0.0
        %687 = vmatpush1.msra.mxu0 0.0
        %688 = vmatprep.subr.mxu0 0.0
        %689 = vmatpush1.msra.mxu0 0.0
        %690 = vmatprep.subr.mxu0 0.0
        %691 = vmatpush1.msra.mxu0 0.0
        %692 = vmatprep.subr.mxu0 0.0
        %693 = vmatpush1.msra.mxu0 0.0
        %694 = vmatprep.subr.mxu0 0.0
        %695 = vmatpush1.msra.mxu0 0.0
        %696 = vmatprep.subr.mxu0 0.0
        %697 = vmatpush1.msra.mxu0 0.0
        %698 = vmatprep.subr.mxu0 0.0
        %699 = vmatpush1.msra.mxu0 0.0
        %700 = vmatprep.subr.mxu0 0.0
        %701 = vmatpush1.msra.mxu0 0.0
        %702 = vmatprep.subr.mxu0 0.0
        %703 = vmatpush1.msra.mxu0 0.0
        %704 = vmatprep.mubr.f32.mxu0 0.0
        %705 = vmatmul.mubr.f32.gmra.mrb[0].mxu0 %v635
        %v706 = vpop.f32.mrb[0].mxu0
        %v707 = vadd.f32 %v274, %v706
        %v708 = vpop.f32.mrb[0].mxu0
        %709 = vdwg.mxu0
        %710 = vxpose.xlu0.b32.start [1/16] %v707, 128
        %711 = vxpose.xlu0.b32.cont [2/16] 0.0, 128
        %712 = vxpose.xlu0.b32.cont [3/16] 0.0, 128
        %713 = vxpose.xlu0.b32.cont [4/16] 0.0, 128
        %714 = vxpose.xlu0.b32.cont [5/16] 0.0, 128
        %715 = vxpose.xlu0.b32.cont [6/16] 0.0, 128
        %716 = vxpose.xlu0.b32.cont [7/16] 0.0, 128
        %717 = vxpose.xlu0.b32.cont [8/16] 0.0, 128
        %718 = vxpose.xlu0.b32.cont [9/16] 0.0, 128
        %719 = vxpose.xlu0.b32.cont [10/16] 0.0, 128
        %720 = vxpose.xlu0.b32.cont [11/16] 0.0, 128
        %721 = vxpose.xlu0.b32.cont [12/16] 0.0, 128
        %722 = vxpose.xlu0.b32.cont [13/16] 0.0, 128
        %723 = vxpose.xlu0.b32.cont [14/16] 0.0, 128
        %724 = vxpose.xlu0.b32.cont [15/16] 0.0, 128
        %725 = vxpose.xlu0.b32.end [16/16] 0.0, 128
        %v726 = vpop.trf.xlu0
        %v727 = vpop.trf.xlu0
        %v728 = vpop.trf.xlu0
        %v729 = vpop.trf.xlu0
        %v730 = vpop.trf.xlu0
        %v731 = vpop.trf.xlu0
        %v732 = vpop.trf.xlu0
        %v733 = vpop.trf.xlu0
        %v734 = vpop.trf.xlu0
        %v735 = vpop.trf.xlu0
        %v736 = vpop.trf.xlu0
        %v737 = vpop.trf.xlu0
        %v738 = vpop.trf.xlu0
        %v739 = vpop.trf.xlu0
        %v740 = vpop.trf.xlu0
        %v741 = vpop.trf.xlu0
        %743 = vset.pattern.permute.xlu0 0
        %744 = vperm.xlu0 %743, %v707
        %v745 = vpop.permute.xlu0 %744
        %v747 = vlaneseq
        %v748 = vshrl.u32 %v747, 7
        %v749 = vsub.s32 0, %v748
        %v750 = vrot.slane %v726, %v749
        %v751 = vmul.f32 %v745, %v750
        %v752 = vsel %vm557, %v751, -inf
        %753 = vmax.xlane.f32.xlu0 %v752
        %v754 = vpop.xlane.xlu0 %753
        %v755 = vsub.f32 %v751, %v754
        %v756 = vmul.f32 %v755, 1.442695
        %v757 = vpow.pop %v756
        %v758 = vsel %vm557, %v757, 0.0
        %759 = vadd.xlane.f32.xlu0 %v758
        %v760 = vpop.xlane.xlu0 %759
        %v761 = vrcp.pop %v760
        %v762 = vmul.f32 %v757, %v761
        %v764 = vsel %vm557, %v762, 0
        %766 = vmatprep.subr.mxu0 %v551
        %767 = vmatpush1.msra.mxu0 %v550
        %768 = vmatprep.subr.mxu0 0.0
        %769 = vmatpush1.msra.mxu0 0.0
        %770 = vmatprep.subr.mxu0 0.0
        %771 = vmatpush1.msra.mxu0 0.0
        %772 = vmatprep.subr.mxu0 0.0
        %773 = vmatpush1.msra.mxu0 0.0
        %774 = vmatprep.subr.mxu0 0.0
        %775 = vmatpush1.msra.mxu0 0.0
        %776 = vmatprep.subr.mxu0 0.0
        %777 = vmatpush1.msra.mxu0 0.0
        %778 = vmatprep.subr.mxu0 0.0
        %779 = vmatpush1.msra.mxu0 0.0
        %780 = vmatprep.subr.mxu0 0.0
        %781 = vmatpush1.msra.mxu0 0.0
        %782 = vmatprep.subr.mxu0 0.0
        %783 = vmatpush1.msra.mxu0 0.0
        %784 = vmatprep.subr.mxu0 0.0
        %785 = vmatpush1.msra.mxu0 0.0
        %786 = vmatprep.subr.mxu0 0.0
        %787 = vmatpush1.msra.mxu0 0.0
        %788 = vmatprep.subr.mxu0 0.0
        %789 = vmatpush1.msra.mxu0 0.0
        %790 = vmatprep.subr.mxu0 0.0
        %791 = vmatpush1.msra.mxu0 0.0
        %792 = vmatprep.subr.mxu0 0.0
        %793 = vmatpush1.msra.mxu0 0.0
        %794 = vmatprep.subr.mxu0 0.0
        %795 = vmatpush1.msra.mxu0 0.0
        %796 = vmatprep.subr.mxu0 0.0
        %797 = vmatpush1.msra.mxu0 0.0
        %798 = vmatprep.subr.mxu0 0.0
        %799 = vmatpush1.msra.mxu0 0.0
        %800 = vmatprep.subr.mxu0 0.0
        %801 = vmatpush1.msra.mxu0 0.0
        %802 = vmatprep.subr.mxu0 0.0
        %803 = vmatpush1.msra.mxu0 0.0
        %804 = vmatprep.subr.mxu0 0.0
        %805 = vmatpush1.msra.mxu0 0.0
        %806 = vmatprep.subr.mxu0 0.0
        %807 = vmatpush1.msra.mxu0 0.0
        %808 = vmatprep.subr.mxu0 0.0
        %809 = vmatpush1.msra.mxu0 0.0
        %810 = vmatprep.subr.mxu0 0.0
        %811 = vmatpush1.msra.mxu0 0.0
        %812 = vmatprep.subr.mxu0 0.0
        %813 = vmatpush1.msra.mxu0 0.0
        %814 = vmatprep.subr.mxu0 0.0
        %815 = vmatpush1.msra.mxu0 0.0
        %816 = vmatprep.subr.mxu0 0.0
        %817 = vmatpush1.msra.mxu0 0.0
        %818 = vmatprep.subr.mxu0 0.0
        %819 = vmatpush1.msra.mxu0 0.0
        %820 = vmatprep.subr.mxu0 0.0
        %821 = vmatpush1.msra.mxu0 0.0
        %822 = vmatprep.subr.mxu0 0.0
        %823 = vmatpush1.msra.mxu0 0.0
        %824 = vmatprep.subr.mxu0 0.0
        %825 = vmatpush1.msra.mxu0 0.0
        %826 = vmatprep.subr.mxu0 0.0
        %827 = vmatpush1.msra.mxu0 0.0
        %828 = vmatprep.subr.mxu0 0.0
        %829 = vmatpush1.msra.mxu0 0.0
        %830 = vmatprep.mubr.f32.mxu0 0.0
        %831 = vmatmul.mubr.f32.gmra.mrb[0].mxu0 %v764
        %v832 = vpop.f32.mrb[0].mxu0
        %v833 = vadd.f32 0.0, %v832
        %v834 = vpop.f32.mrb[0].mxu0
        %v835 = vadd.f32 0.0, %v834
        %836 = vdwg.mxu0
        %v837 = vadd.f32 %v550, %v833
        %v838 = vadd.f32 %v551, %v835
        %839 = vst [vmem:[%s213] sm:$0xff] %v837
        %840 = vst [vmem:[%s213 + $0x8] sm:$0xff] %v838
        %s841 = sand.u32 %s97, 1
        %s842 = scalar_lea.sflag [#allocation5], %s841
        %s843 = sand.u32 %s97, 1
        %s844 = smul.addr %s843, 16
        %s845 = scalar_lea.vmem [#allocation9], %s844
        // Predicated region
        $region45: #{tpu_custom_call.1} parent=31 // pred_check
          %p846 = pneg %p107
        $region46: #{tpu_custom_call.1} parent=31 // pred_check_branch
          %848 = sbr.rel (%p846) target = $region48
        $region47: #{tpu_custom_call.1} parent=31 // pred_region
          %s850 = ssub.s32 256, 256
          %851 = vsyncadd %s842, %s850
          %s852 = smul.addr %s21, 2
          %s853 = smul.addr %s852, 128
          %s854 = scalar_lea.hbm %s3, %s853
          %s856 = sshll.u32 %s845, 4
          %s857 = int_to_ptr.vmem [resolvable:$true] %s856
          %859 = dma.vmem_to_hbm [thread:$0]  %s857, 256, %s854, %s842
        $region48: #{tpu_custom_call.1} parent=31 // pred_fallthru
          _
      $region32: #{tpu_custom_call.1} parent=5 // pred_fallthru
        _
      %p860 = scmp.le.s32.totalorder 2, %s16
      // Predicated region
      $region49: #{tpu_custom_call.1} parent=5 // pred_check
        %p861 = pneg %p860
      $region50: #{tpu_custom_call.1} parent=5 // pred_check_branch
        %863 = sbr.rel (%p861) target = $region52
      $region51: #{tpu_custom_call.1} parent=5 // pred_region
        %s864 = ssub.s32 %s16, 2
        // Predicated region
        $region53: #{tpu_custom_call.1} parent=51 // pred_check
          %p865 = pneg %p113
        $region54: #{tpu_custom_call.1} parent=51 // pred_check_branch
          %867 = sbr.rel (%p865) target = $region56
        $region55: #{tpu_custom_call.1} parent=51 // pred_region
          %s868 = sand.u32 %s98, 1
          %s869 = scalar_lea.sflag [#allocation5], %s868
          %s870 = sand.u32 %s98, 1
          %s871 = smul.addr %s870, 16
          %s872 = scalar_lea.vmem [#allocation9], %s871
          %873 = dma.done %s869, 256
        $region56: #{tpu_custom_call.1} parent=51 // pred_fallthru
          _
      $region52: #{tpu_custom_call.1} parent=5 // pred_fallthru
        _
    $region6: #{tpu_custom_call.1} parent=1 // loop_footer
      %s20 = sadd.s32 1, %s16
    $region7: #{tpu_custom_call.1} parent=1 // loop_footer_branch
      %15 = sbr.rel target = $region3
    $region8: #{tpu_custom_call.1} parent=1 // loop_exit
      _
    %874 = vsyncpa [#allocation4], 1
    %s875 = scalar_lea.sflag [#allocation4], 1
    %876 = vsyncpa %s875, 1
    %877 = vsyncpa [#allocation7], 1
    %878 = vsyncpa [#allocation5], 1
    %s879 = scalar_lea.sflag [#allocation5], 1
    %880 = vsyncpa %s879, 1

</llo_original>
